<compile_context>
chip_gen: v5e
topology: v5e:2x2
jax: 0.10.0
libtpu: 0.0.40
codegen_flags: <defaults>
</compile_context>

<pallas_src>
import functools

import jax
import jax.numpy as jnp
from jax.experimental import pallas as pl
from jax.experimental.pallas import tpu as pltpu


# --------------------------------------------------------------------------
# Kernel 1: LayerNorm + lane-dense QKV projection
# --------------------------------------------------------------------------
def _ln_qkv_kernel(x_ref, gamma_ref, beta_ref, wqkv_ref, q_ref, k_ref, v_ref,
                   *, inner, eps, matmul_dtype):
    """One (batch, seq-tile) block: LN over D, then (tn, D) @ (D, 3*inner)."""
    x = x_ref[0].astype(jnp.float32)                                  # (tn, D)

    # LayerNorm (torch default: biased variance, eps=1e-5), kept in f32.
    mean = jnp.mean(x, axis=-1, keepdims=True)
    var = jnp.mean(jnp.square(x - mean), axis=-1, keepdims=True)
    xn = (x - mean) * jax.lax.rsqrt(var + eps)
    xn = xn * gamma_ref[...].astype(jnp.float32) + beta_ref[...].astype(jnp.float32)

    # One fat matmul, lane width 3*inner, contraction depth D, f32 accumulate.
    qkv = jnp.dot(xn.astype(matmul_dtype), wqkv_ref[...],
                  preferred_element_type=jnp.float32)                 # (tn, 3*inner)

    q_ref[0] = qkv[:, :inner].astype(q_ref.dtype)          # scale already folded in
    k_ref[0] = qkv[:, inner:2 * inner].astype(k_ref.dtype)
    v_ref[0] = qkv[:, 2 * inner:].astype(v_ref.dtype)


# --------------------------------------------------------------------------
# Kernel 2: flash-style multi-head attention + output projection
# --------------------------------------------------------------------------
def _flash_attn_out_kernel(q_ref, k_ref, v_ref, wout_ref, o_ref,
                           m_sc, l_sc, acc_sc, *, heads, dim_head, matmul_dtype):
    """Grid = (b, q-tile, kv-tile); kv-tile is the innermost ('arbitrary') axis.

    q_ref    : (1, tq, inner)       Q tile (scale pre-folded)
    k_ref    : (1, tk, inner)       K tile
    v_ref    : (1, tk, inner)       V tile
    wout_ref : (heads, dh, D)       output projection, head-major rows of (inner, D)
    o_ref    : (1, tq, D)
    m_sc,l_sc: (heads, tq, 1) f32   online-softmax running max / denom
    acc_sc   : (heads, tq, dh) f32  running weighted-V accumulator
    """
    ki = pl.program_id(2)

    @pl.when(ki == 0)
    def _init():
        m_sc[...] = jnp.full(m_sc.shape, -jnp.inf, m_sc.dtype)
        l_sc[...] = jnp.zeros(l_sc.shape, l_sc.dtype)
        acc_sc[...] = jnp.zeros(acc_sc.shape, acc_sc.dtype)

    tq = q_ref.shape[1]
    tk = k_ref.shape[1]
    qh = q_ref[0].reshape(tq, heads, dim_head).astype(matmul_dtype)
    kh = k_ref[0].reshape(tk, heads, dim_head).astype(matmul_dtype)
    vh = v_ref[0].reshape(tk, heads, dim_head).astype(matmul_dtype)

    # Per-head scores (heads, tq, tk); f32 accumulation on the MXU.
    s = jnp.einsum("qhd,khd->hqk", qh, kh, preferred_element_type=jnp.float32)

    m_prev = m_sc[...]
    m_new = jnp.maximum(m_prev, jnp.max(s, axis=-1, keepdims=True))
    alpha = jnp.exp(m_prev - m_new)
    p = jnp.exp(s - m_new)
    l_sc[...] = alpha * l_sc[...] + jnp.sum(p, axis=-1, keepdims=True)
    acc_sc[...] = alpha * acc_sc[...] + jnp.einsum(
        "hqk,khd->hqd", p.astype(matmul_dtype), vh,
        preferred_element_type=jnp.float32)
    m_sc[...] = m_new

    @pl.when(ki == pl.num_programs(2) - 1)
    def _finalize():
        # Exact division (once per q-tile; negligible cost, tight accuracy).
        oh = acc_sc[...] / l_sc[...]                                   # (h, tq, dh) f32
        # Output projection with the head-sum folded into the contraction:
        # one dot_general of depth inner = heads*dh instead of `heads` matmuls.
        out = jnp.einsum("hqd,hdo->qo", oh.astype(matmul_dtype), wout_ref[...],
                         preferred_element_type=jnp.float32)           # (tq, D)
        o_ref[0] = out.astype(o_ref.dtype)


# --------------------------------------------------------------------------
# Wrapper
# --------------------------------------------------------------------------
def attention_pallas(x, gamma, beta, w_qkv, w_out, *, heads, dim_head,
                     matmul_dtype=jnp.bfloat16,
                     seq_tile=256, q_tile=256, kv_tile=256):
    """x: (B, N, D); w_qkv: (D, 3*heads*dim_head); w_out: (heads*dim_head, D)."""
    B, N, D = x.shape
    inner = heads * dim_head
    assert w_qkv.shape == (D, 3 * inner)
    assert w_out.shape == (inner, D)
    scale = float(dim_head) ** -0.5

    # Fold the attention scale into the Q columns (constant fold, lane-dense layout kept).
    w_qkv_f = w_qkv.at[:, :inner].multiply(scale).astype(matmul_dtype)   # (D, 3*inner)
    # Head-major view of W_out rows; last dim stays D (lane-dense).
    w_out_h = w_out.reshape(heads, dim_head, D).astype(matmul_dtype)     # (h, dh, D)

    gamma2 = gamma.reshape(1, D).astype(jnp.float32)
    beta2 = beta.reshape(1, D).astype(jnp.float32)

    tn = min(seq_tile, N)
    tq = min(q_tile, N)
    tk = min(kv_tile, N)
    assert N % tn == 0 and N % tq == 0 and N % tk == 0, \
        "TODO(synk): ragged sequence lengths need masked tail tiles"

    # ---- Kernel 1: LayerNorm + QKV projection -> q, k, v in matmul_dtype ----
    qkv_out = jax.ShapeDtypeStruct((B, N, inner), matmul_dtype)
    q, k, v = pl.pallas_call(
        functools.partial(_ln_qkv_kernel, inner=inner, eps=1e-5,
                          matmul_dtype=matmul_dtype),
        out_shape=(qkv_out, qkv_out, qkv_out),
        grid_spec=pltpu.PrefetchScalarGridSpec(
            num_scalar_prefetch=0,
            grid=(B, N // tn),
            in_specs=[
                pl.BlockSpec((1, tn, D), lambda b, i: (b, i, 0)),        # x tile
                pl.BlockSpec((1, D), lambda b, i: (0, 0)),               # gamma
                pl.BlockSpec((1, D), lambda b, i: (0, 0)),               # beta
                pl.BlockSpec((D, 3 * inner), lambda b, i: (0, 0)),       # W_qkv (lane-dense)
            ],
            out_specs=[pl.BlockSpec((1, tn, inner), lambda b, i: (b, i, 0))] * 3,
        ),
        compiler_params=pltpu.CompilerParams(
            dimension_semantics=("parallel", "parallel")),
    )(x, gamma2, beta2, w_qkv_f)

    # ---- Kernel 2: flash attention + output projection ----
    out = pl.pallas_call(
        functools.partial(_flash_attn_out_kernel, heads=heads, dim_head=dim_head,
                          matmul_dtype=matmul_dtype),
        out_shape=jax.ShapeDtypeStruct((B, N, D), x.dtype),
        grid_spec=pltpu.PrefetchScalarGridSpec(
            num_scalar_prefetch=0,
            grid=(B, N // tq, N // tk),
            in_specs=[
                pl.BlockSpec((1, tq, inner), lambda b, qi, ki: (b, qi, 0)),   # Q tile
                pl.BlockSpec((1, tk, inner), lambda b, qi, ki: (b, ki, 0)),   # K tile
                pl.BlockSpec((1, tk, inner), lambda b, qi, ki: (b, ki, 0)),   # V tile
                pl.BlockSpec((heads, dim_head, D), lambda b, qi, ki: (0, 0, 0)),  # W_out
            ],
            out_specs=pl.BlockSpec((1, tq, D), lambda b, qi, ki: (b, qi, 0)),
            scratch_shapes=[
                pltpu.VMEM((heads, tq, 1), jnp.float32),          # running max m
                pltpu.VMEM((heads, tq, 1), jnp.float32),          # running denom l
                pltpu.VMEM((heads, tq, dim_head), jnp.float32),   # running acc
            ]),
        compiler_params=pltpu.CompilerParams(
            dimension_semantics=("parallel", "parallel", "arbitrary"),
            vmem_limit_bytes=32 * 1024 * 1024),
    )(q, k, v, w_out_h)
    return out


# --------------------------------------------------------------------------
# Pure-JAX reference mirroring the PyTorch forward pass
# --------------------------------------------------------------------------
def attention_reference(x, gamma, beta, w_qkv, w_out, *, heads, dim_head):
    B, N, D = x.shape
    inner = heads * dim_head
    scale = float(dim_head) ** -0.5
    mean = jnp.mean(x, axis=-1, keepdims=True)
    var = jnp.mean((x - mean) ** 2, axis=-1, keepdims=True)
    xn = (x - mean) / jnp.sqrt(var + 1e-5) * gamma + beta
    qkv = xn @ w_qkv
    q, k, v = jnp.split(qkv, 3, axis=-1)

    def split_heads(t):
        return t.reshape(B, N, heads, dim_head).transpose(0, 2, 1, 3)  # b h n d

    q, k, v = map(split_heads, (q, k, v))
    dots = jnp.einsum("bhnd,bhmd->bhnm", q, k) * scale
    attn = jax.nn.softmax(dots, axis=-1)
    out = jnp.einsum("bhnm,bhmd->bhnd", attn, v)
    out = out.transpose(0, 2, 1, 3).reshape(B, N, inner)
    return out @ w_out


if __name__ == "__main__":
    # Small shapes consistent with the module: dim=32, heads=4, dim_head=8 -> inner_dim=32
    B, N, D = 2, 8, 32
    heads, dim_head = 4, 8
    inner = heads * dim_head

    key = jax.random.PRNGKey(0)
    kx, kq, ko, kg, kb = jax.random.split(key, 5)

    x = jax.random.normal(kx, (B, N, D), dtype=jnp.float32)
    # Linear weights stored as (in, out); no bias (matches nn.Linear(bias=False)).
    w_qkv = jax.random.normal(kq, (D, 3 * inner), dtype=jnp.float32) * (D ** -0.5)
    w_out = jax.random.normal(ko, (inner, D), dtype=jnp.float32) * (inner ** -0.5)
    gamma = 1.0 + 0.1 * jax.random.normal(kg, (D,), dtype=jnp.float32)
    beta = 0.1 * jax.random.normal(kb, (D,), dtype=jnp.float32)

    ref = attention_reference(x, gamma, beta, w_qkv, w_out,
                              heads=heads, dim_head=dim_head)

    # f32 MXU-feed path: tight parity with the reference.
    out_f32 = attention_pallas(x, gamma, beta, w_qkv, w_out, heads=heads,
                               dim_head=dim_head, matmul_dtype=jnp.float32)
    out_f32 = jax.block_until_ready(out_f32)
    assert out_f32.shape == (B, N, D)
    err_f32 = float(jnp.max(jnp.abs(out_f32 - ref)))
    assert jnp.allclose(out_f32, ref, atol=1e-3, rtol=1e-3), \
        f"f32 max abs err {err_f32}"

    # Default bf16 MXU-feed / f32-accumulate path (fast on v5e/v6e/v7x).
    out_bf16 = attention_pallas(x, gamma, beta, w_qkv, w_out,
                                heads=heads, dim_head=dim_head)
    out_bf16 = jax.block_until_ready(out_bf16)
    err_bf16 = float(jnp.max(jnp.abs(out_bf16 - ref)))
    assert jnp.allclose(out_bf16, ref, atol=1e-1, rtol=1e-1), \
        f"bf16 max abs err {err_bf16}"

    print("KERNEL_OK")
</pallas_src>

<mosaic_0001>
module attributes {stable_mosaic.version = 11 : i64} {
  func.func @_ln_qkv_kernel(%arg0: i32, %arg1: i32, %arg2: memref<1x8x32xf32, #tpu.memory_space<vmem>>, %arg3: memref<1x32xf32, #tpu.memory_space<vmem>>, %arg4: memref<1x32xf32, #tpu.memory_space<vmem>>, %arg5: memref<32x96xf32, #tpu.memory_space<vmem>>, %arg6: memref<1x8x32xf32, #tpu.memory_space<vmem>>, %arg7: memref<1x8x32xf32, #tpu.memory_space<vmem>>, %arg8: memref<1x8x32xf32, #tpu.memory_space<vmem>>) attributes {dimension_semantics = [#tpu.dimension_semantics<parallel>, #tpu.dimension_semantics<parallel>], iteration_bounds = array<i64: 2, 1>, scalar_prefetch = 0 : i64, scratch_operands = 0 : i64, tpu.core_type = #tpu.core_type<tc>, window_params = [{transform_indices = @transform_0, window_bounds = array<i64: 1, 8, 32>}, {pipeline_mode = #tpu.pipeline_mode<synchronous>, transform_indices = @transform_1, window_bounds = array<i64: 1, 32>}, {pipeline_mode = #tpu.pipeline_mode<synchronous>, transform_indices = @transform_2, window_bounds = array<i64: 1, 32>}, {pipeline_mode = #tpu.pipeline_mode<synchronous>, transform_indices = @transform_3, window_bounds = array<i64: 32, 96>}, {transform_indices = @transform_4, window_bounds = array<i64: 1, 8, 32>}, {transform_indices = @transform_5, window_bounds = array<i64: 1, 8, 32>}, {transform_indices = @transform_6, window_bounds = array<i64: 1, 8, 32>}]} {
    %c0 = arith.constant 0 : index
    %c0_0 = arith.constant 0 : index
    %c0_1 = arith.constant 0 : index
    %0 = vector.load %arg2[%c0, %c0_0, %c0_1] : memref<1x8x32xf32, #tpu.memory_space<vmem>>, vector<1x8x32xf32>
    %1 = vector.shape_cast %0 : vector<1x8x32xf32> to vector<8x32xf32>
    %cst = arith.constant dense<0.000000e+00> : vector<8xf32>
    %2 = vector.multi_reduction <add>, %1, %cst [1] : vector<8x32xf32> to vector<8xf32>
    %3 = vector.shape_cast %2 : vector<8xf32> to vector<8x1xf32>
    %cst_2 = arith.constant 3.200000e+01 : f32
    %4 = vector.broadcast %cst_2 : f32 to vector<8x1xf32>
    %5 = arith.divf %3, %4 : vector<8x1xf32>
    %6 = vector.broadcast %5 : vector<8x1xf32> to vector<8x32xf32>
    %7 = arith.subf %1, %6 : vector<8x32xf32>
    %8 = arith.mulf %7, %7 : vector<8x32xf32>
    %cst_3 = arith.constant dense<0.000000e+00> : vector<8xf32>
    %9 = vector.multi_reduction <add>, %8, %cst_3 [1] : vector<8x32xf32> to vector<8xf32>
    %10 = vector.shape_cast %9 : vector<8xf32> to vector<8x1xf32>
    %cst_4 = arith.constant 3.200000e+01 : f32
    %11 = vector.broadcast %cst_4 : f32 to vector<8x1xf32>
    %12 = arith.divf %10, %11 : vector<8x1xf32>
    %13 = vector.broadcast %5 : vector<8x1xf32> to vector<8x32xf32>
    %14 = arith.subf %1, %13 : vector<8x32xf32>
    %cst_5 = arith.constant 9.99999974E-6 : f32
    %15 = vector.broadcast %cst_5 : f32 to vector<8x1xf32>
    %16 = arith.addf %12, %15 : vector<8x1xf32>
    %17 = math.rsqrt %16 : vector<8x1xf32>
    %18 = vector.broadcast %17 : vector<8x1xf32> to vector<8x32xf32>
    %19 = arith.mulf %14, %18 : vector<8x32xf32>
    %c0_6 = arith.constant 0 : index
    %c0_7 = arith.constant 0 : index
    %20 = vector.load %arg3[%c0_6, %c0_7] : memref<1x32xf32, #tpu.memory_space<vmem>>, vector<1x32xf32>
    %21 = vector.broadcast %20 : vector<1x32xf32> to vector<8x32xf32>
    %22 = arith.mulf %19, %21 : vector<8x32xf32>
    %c0_8 = arith.constant 0 : index
    %c0_9 = arith.constant 0 : index
    %23 = vector.load %arg4[%c0_8, %c0_9] : memref<1x32xf32, #tpu.memory_space<vmem>>, vector<1x32xf32>
    %24 = vector.broadcast %23 : vector<1x32xf32> to vector<8x32xf32>
    %25 = arith.addf %22, %24 : vector<8x32xf32>
    %c0_10 = arith.constant 0 : index
    %c0_11 = arith.constant 0 : index
    %26 = vector.load %arg5[%c0_10, %c0_11] : memref<32x96xf32, #tpu.memory_space<vmem>>, vector<32x96xf32>
    %cst_12 = arith.constant dense<0.000000e+00> : vector<8x96xf32>
    %27 = tpu.matmul %25, %26, %cst_12 {dimension_numbers = #tpu.dot_dimension_numbers<[1], [0], [0], [1], [0, 0, 1, 1], [], []>} : vector<8x32xf32>, vector<32x96xf32>, vector<8x96xf32> -> vector<8x96xf32>
    %28 = vector.extract_strided_slice %27 {offsets = [0, 0], sizes = [8, 32], strides = [1, 1]} : vector<8x96xf32> to vector<8x32xf32>
    %c0_13 = arith.constant 0 : index
    %c0_14 = arith.constant 0 : index
    %c0_15 = arith.constant 0 : index
    %29 = vector.load %arg6[%c0_13, %c0_14, %c0_15] : memref<1x8x32xf32, #tpu.memory_space<vmem>>, vector<1x8x32xf32>
    %30 = vector.shape_cast %29 : vector<1x8x32xf32> to vector<8x32xf32>
    %31 = vector.shape_cast %28 : vector<8x32xf32> to vector<1x8x32xf32>
    tpu.vector_store %arg6[%c0_13, %c0_14, %c0_15], %31 {strides = array<i32>} : memref<1x8x32xf32, #tpu.memory_space<vmem>>, vector<1x8x32xf32>,
    %32 = vector.extract_strided_slice %27 {offsets = [0, 32], sizes = [8, 32], strides = [1, 1]} : vector<8x96xf32> to vector<8x32xf32>
    %c0_16 = arith.constant 0 : index
    %c0_17 = arith.constant 0 : index
    %c0_18 = arith.constant 0 : index
    %33 = vector.load %arg7[%c0_16, %c0_17, %c0_18] : memref<1x8x32xf32, #tpu.memory_space<vmem>>, vector<1x8x32xf32>
    %34 = vector.shape_cast %33 : vector<1x8x32xf32> to vector<8x32xf32>
    %35 = vector.shape_cast %32 : vector<8x32xf32> to vector<1x8x32xf32>
    tpu.vector_store %arg7[%c0_16, %c0_17, %c0_18], %35 {strides = array<i32>} : memref<1x8x32xf32, #tpu.memory_space<vmem>>, vector<1x8x32xf32>,
    %36 = vector.extract_strided_slice %27 {offsets = [0, 64], sizes = [8, 32], strides = [1, 1]} : vector<8x96xf32> to vector<8x32xf32>
    %c0_19 = arith.constant 0 : index
    %c0_20 = arith.constant 0 : index
    %c0_21 = arith.constant 0 : index
    %37 = vector.load %arg8[%c0_19, %c0_20, %c0_21] : memref<1x8x32xf32, #tpu.memory_space<vmem>>, vector<1x8x32xf32>
    %38 = vector.shape_cast %37 : vector<1x8x32xf32> to vector<8x32xf32>
    %39 = vector.shape_cast %36 : vector<8x32xf32> to vector<1x8x32xf32>
    tpu.vector_store %arg8[%c0_19, %c0_20, %c0_21], %39 {strides = array<i32>} : memref<1x8x32xf32, #tpu.memory_space<vmem>>, vector<1x8x32xf32>,
    return
  }
  func.func @transform_0(%arg0: i32, %arg1: i32) -> (i32, i32, i32) {
    %c0_i32 = arith.constant 0 : i32
    %c0_i32_0 = arith.constant 0 : i32
    return %arg0, %arg1, %c0_i32 : i32, i32, i32
  }
  func.func @transform_1(%arg0: i32, %arg1: i32) -> (i32, i32) {
    %c0_i32 = arith.constant 0 : i32
    %c0_i32_0 = arith.constant 0 : i32
    %c0_i32_1 = arith.constant 0 : i32
    return %c0_i32, %c0_i32_0 : i32, i32
  }
  func.func @transform_2(%arg0: i32, %arg1: i32) -> (i32, i32) {
    %c0_i32 = arith.constant 0 : i32
    %c0_i32_0 = arith.constant 0 : i32
    %c0_i32_1 = arith.constant 0 : i32
    return %c0_i32, %c0_i32_0 : i32, i32
  }
  func.func @transform_3(%arg0: i32, %arg1: i32) -> (i32, i32) {
    %c0_i32 = arith.constant 0 : i32
    %c0_i32_0 = arith.constant 0 : i32
    %c0_i32_1 = arith.constant 0 : i32
    return %c0_i32, %c0_i32_0 : i32, i32
  }
  func.func @transform_4(%arg0: i32, %arg1: i32) -> (i32, i32, i32) {
    %c0_i32 = arith.constant 0 : i32
    %c0_i32_0 = arith.constant 0 : i32
    return %arg0, %arg1, %c0_i32 : i32, i32, i32
  }
  func.func @transform_5(%arg0: i32, %arg1: i32) -> (i32, i32, i32) {
    %c0_i32 = arith.constant 0 : i32
    %c0_i32_0 = arith.constant 0 : i32
    return %arg0, %arg1, %c0_i32 : i32, i32, i32
  }
  func.func @transform_6(%arg0: i32, %arg1: i32) -> (i32, i32, i32) {
    %c0_i32 = arith.constant 0 : i32
    %c0_i32_0 = arith.constant 0 : i32
    return %arg0, %arg1, %c0_i32 : i32, i32, i32
  }
}

</mosaic_0001>

<llo_original>
// kernel: tpu_custom_call.1
$region0: #{tpu_custom_call.1}
  #allocation0 [shape = 'u32[]', space=smem, size = 0x4, offset = 0x4, fixed_abs, tag = 'smem constant byte address 0x4 - core index']
  #allocation1 [shape = 'u32[72,128]{1,0:T(1,128)}', space=vmem, size = 0x9000, scoped, tag = 'internal scratch']
  %s0 = inlined_call_operand.hbm [shape: f32[2,8,32], index: 0, kind: input, shape index: {}]
  %s1 = inlined_call_operand.hbm [shape: f32[1,32], index: 1, kind: input, shape index: {}]
  %s2 = inlined_call_operand.vmem [shape: f32[1,32], index: 2, kind: input, shape index: {}]
  %s3 = inlined_call_operand.hbm [shape: f32[32,96], index: 3, kind: input, shape index: {}]
  %s4 = inlined_call_operand.hbm [shape: f32[2,8,32], index: 4, kind: output, shape index: {0}]
  %s5 = inlined_call_operand.hbm [shape: f32[2,8,32], index: 5, kind: output, shape index: {1}]
  %s6 = inlined_call_operand.hbm [shape: f32[2,8,32], index: 6, kind: output, shape index: {2}]
  %7 = xla_tuple %s4, %s5, %s6
  %s8 = sld [smem:[#allocation0]]
  $region77: #{tpu_custom_call.1} parent=0
    _
  %s10 = ssub.s32 1, %s8
  %s11 = scalar_select 0, %s10, %s8
  $region1: #{tpu_custom_call.1} parent=0
    #allocation2 [shape = 'u8[8192]{0}', space=vmem, size = 0x2000, scoped, tag = 'input window, operand 0']
    #allocation3 [shape = 's32[2]{0}', space=sflag, size = 0x8, scoped, tag = 'scoped memory for tpu_custom_call.1']
    #allocation4 [shape = 's32[2]{0}', space=sflag, size = 0x8, scoped, tag = 'scoped memory for tpu_custom_call.1']
    #allocation5 [shape = 'u8[512]{0}', space=vmem, size = 0x400, scoped, tag = 'input window, operand 1, single buffered']
    #allocation6 [shape = 's32[1]{0}', space=sflag, size = 0x4, scoped, tag = 'scoped memory for tpu_custom_call.1']
    #allocation7 [shape = 'u8[16384]{0}', space=vmem, size = 0x4000, scoped, tag = 'input window, operand 3, single buffered']
    #allocation8 [shape = 'u8[8192]{0}', space=vmem, size = 0x2000, scoped, tag = 'output window, operand 0']
    #allocation9 [shape = 'u8[8192]{0}', space=vmem, size = 0x2000, scoped, tag = 'output window, operand 1']
    #allocation10 [shape = 's32[2]{0}', space=sflag, size = 0x8, scoped, tag = 'scoped memory for tpu_custom_call.1']
    #allocation11 [shape = 'u8[8192]{0}', space=vmem, size = 0x2000, scoped, tag = 'output window, operand 2']
    %12 = vsyncpa [#allocation3], 0
    %s13 = scalar_lea.sflag [#allocation3], 1
    %14 = vsyncpa %s13, 0
    %15 = vsyncpa [#allocation6], 0
    %16 = vsyncpa [#allocation4], 0
    %s17 = scalar_lea.sflag [#allocation4], 1
    %18 = vsyncpa %s17, 0
    %19 = vsyncpa [#allocation10], 0
    %s20 = scalar_lea.sflag [#allocation10], 1
    %21 = vsyncpa %s20, 0
    loop: start=0, step=1, limit=4
    $region2: #{tpu_custom_call.1} parent=1 // loop_pre_header
      _
    $region3: #{tpu_custom_call.1} parent=1 // loop_header
      %s23 = sphi 0, %s27
      %p24 = scmp.ge.s32.totalorder %s23, 4
      %s30 = sphi 0, %s42
      %s31 = sphi 0, %s38
      %s32 = sphi 0, %s30
      %s33 = sphi 0, %s31
      %s34 = sphi 0, %s32
      %s35 = sphi 0, %s33
      %s47 = sphi 0, %s49
      %s50 = sphi 0, %s47
      %s51 = sphi 0, %s50
      %s67 = sphi 0, %s51
      %s71 = sphi 0, %s71
      %s73 = sphi 0, %s71
      %s74 = sphi 0, %s73
      %s88 = sphi 0, %s74
      %s92 = sphi 0, %s92
      %s94 = sphi 0, %s92
      %s95 = sphi 0, %s94
      %s109 = sphi 0, %s95
      %s113 = sphi 0, %s113
      %s115 = sphi 0, %s113
      %s116 = sphi 0, %s115
      %s130 = sphi 0, %s116
      %s138 = sphi 0, %s140
      %s141 = sphi 0, %s138
      %s142 = sphi 0, %s141
      %s158 = sphi 0, %s142
      %s166 = sphi 0, %s168
      %s169 = sphi 0, %s166
      %s170 = sphi 0, %s169
      %s186 = sphi 0, %s170
      %s194 = sphi 0, %s196
      %s197 = sphi 0, %s194
      %s198 = sphi 0, %s197
      %s214 = sphi 0, %s198
    $region4: #{tpu_custom_call.1} parent=1 // loop_header_branch
      %26 = sbr.rel (%p24) target = $region8
    $region5: #{tpu_custom_call.1} parent=1 // loop_body
      %s28 = ssub.s32 %s23, 1
      %s29 = ssub.s32 %s23, 2
      %s36 = sadd.s32 1, %s31
      %p37 = scmp.ge.s32.totalorder %s36, 1
      %s38 = scalar_select %p37, 0, %s36
      %s39 = sadd.s32 1, %s30
      %s40 = scalar_select %p37, %s39, %s30
      %p41 = scmp.ge.s32.totalorder %s40, 2
      %s42 = scalar_select %p41, 0, %s40
      %s43 = ssub.s32 %s30, %s42
      %s44 = ssub.s32 %s31, %s38
      %s45 = sor.u32 %s43, %s44
      %p46 = scmp.eq.s32.totalorder %s45, 0
      %s48 = sadd.s32 %s47, 1
      %s49 = scalar_select %p46, %s47, %s48
      %p52 = pneg %p46
      %p53 = scmp.eq.s32.totalorder %s23, 1
      %p54 = por %p52, %p53
      %p55 = scmp.ne.s32.totalorder %s47, %s50
      %p56 = scmp.eq.s32.totalorder %s23, 0
      %p57 = por %p55, %p56
      %p58 = scmp.ne.s32.totalorder %s47, %s50
      %p59 = scmp.eq.s32.totalorder %s28, 1
      %p60 = por %p58, %p59
      %p61 = scmp.ne.s32.totalorder %s50, %s51
      %p62 = scmp.eq.s32.totalorder %s28, 0
      %p63 = por %p61, %p62
      %p64 = scmp.ne.s32.totalorder %s50, %s51
      %p65 = scmp.eq.s32.totalorder %s29, 1
      %p66 = por %p64, %p65
      %p68 = scmp.ne.s32.totalorder %s51, %s67
      %p69 = scmp.eq.s32.totalorder %s29, 0
      %p70 = por %p68, %p69
      %s72 = sadd.s32 %s71, 1
      %p75 = scmp.eq.s32.totalorder %s23, 1
      %p76 = scmp.ne.s32.totalorder %s71, %s73
      %p77 = scmp.eq.s32.totalorder %s23, 0
      %p78 = por %p76, %p77
      %p79 = scmp.ne.s32.totalorder %s71, %s73
      %p80 = scmp.eq.s32.totalorder %s28, 1
      %p81 = por %p79, %p80
      %p82 = scmp.ne.s32.totalorder %s73, %s74
      %p83 = scmp.eq.s32.totalorder %s28, 0
      %p84 = por %p82, %p83
      %p85 = scmp.ne.s32.totalorder %s73, %s74
      %p86 = scmp.eq.s32.totalorder %s29, 1
      %p87 = por %p85, %p86
      %p89 = scmp.ne.s32.totalorder %s74, %s88
      %p90 = scmp.eq.s32.totalorder %s29, 0
      %p91 = por %p89, %p90
      %s93 = sadd.s32 %s92, 1
      %p96 = scmp.eq.s32.totalorder %s23, 1
      %p97 = scmp.ne.s32.totalorder %s92, %s94
      %p98 = scmp.eq.s32.totalorder %s23, 0
      %p99 = por %p97, %p98
      %p100 = scmp.ne.s32.totalorder %s92, %s94
      %p101 = scmp.eq.s32.totalorder %s28, 1
      %p102 = por %p100, %p101
      %p103 = scmp.ne.s32.totalorder %s94, %s95
      %p104 = scmp.eq.s32.totalorder %s28, 0
      %p105 = por %p103, %p104
      %p106 = scmp.ne.s32.totalorder %s94, %s95
      %p107 = scmp.eq.s32.totalorder %s29, 1
      %p108 = por %p106, %p107
      %p110 = scmp.ne.s32.totalorder %s95, %s109
      %p111 = scmp.eq.s32.totalorder %s29, 0
      %p112 = por %p110, %p111
      %s114 = sadd.s32 %s113, 1
      %p117 = scmp.eq.s32.totalorder %s23, 1
      %p118 = scmp.ne.s32.totalorder %s113, %s115
      %p119 = scmp.eq.s32.totalorder %s23, 0
      %p120 = por %p118, %p119
      %p121 = scmp.ne.s32.totalorder %s113, %s115
      %p122 = scmp.eq.s32.totalorder %s28, 1
      %p123 = por %p121, %p122
      %p124 = scmp.ne.s32.totalorder %s115, %s116
      %p125 = scmp.eq.s32.totalorder %s28, 0
      %p126 = por %p124, %p125
      %p127 = scmp.ne.s32.totalorder %s115, %s116
      %p128 = scmp.eq.s32.totalorder %s29, 1
      %p129 = por %p127, %p128
      %p131 = scmp.ne.s32.totalorder %s116, %s130
      %p132 = scmp.eq.s32.totalorder %s29, 0
      %p133 = por %p131, %p132
      %s134 = ssub.s32 %s30, %s42
      %s135 = ssub.s32 %s31, %s38
      %s136 = sor.u32 %s134, %s135
      %p137 = scmp.eq.s32.totalorder %s136, 0
      %s139 = sadd.s32 %s138, 1
      %s140 = scalar_select %p137, %s138, %s139
      %p143 = pneg %p137
      %p144 = scmp.eq.s32.totalorder %s23, 1
      %p145 = por %p143, %p144
      %p146 = scmp.ne.s32.totalorder %s138, %s141
      %p147 = scmp.eq.s32.totalorder %s23, 0
      %p148 = por %p146, %p147
      %p149 = scmp.ne.s32.totalorder %s138, %s141
      %p150 = scmp.eq.s32.totalorder %s28, 1
      %p151 = por %p149, %p150
      %p152 = scmp.ne.s32.totalorder %s141, %s142
      %p153 = scmp.eq.s32.totalorder %s28, 0
      %p154 = por %p152, %p153
      %p155 = scmp.ne.s32.totalorder %s141, %s142
      %p156 = scmp.eq.s32.totalorder %s29, 1
      %p157 = por %p155, %p156
      %p159 = scmp.ne.s32.totalorder %s142, %s158
      %p160 = scmp.eq.s32.totalorder %s29, 0
      %p161 = por %p159, %p160
      %s162 = ssub.s32 %s30, %s42
      %s163 = ssub.s32 %s31, %s38
      %s164 = sor.u32 %s162, %s163
      %p165 = scmp.eq.s32.totalorder %s164, 0
      %s167 = sadd.s32 %s166, 1
      %s168 = scalar_select %p165, %s166, %s167
      %p171 = pneg %p165
      %p172 = scmp.eq.s32.totalorder %s23, 1
      %p173 = por %p171, %p172
      %p174 = scmp.ne.s32.totalorder %s166, %s169
      %p175 = scmp.eq.s32.totalorder %s23, 0
      %p176 = por %p174, %p175
      %p177 = scmp.ne.s32.totalorder %s166, %s169
      %p178 = scmp.eq.s32.totalorder %s28, 1
      %p179 = por %p177, %p178
      %p180 = scmp.ne.s32.totalorder %s169, %s170
      %p181 = scmp.eq.s32.totalorder %s28, 0
      %p182 = por %p180, %p181
      %p183 = scmp.ne.s32.totalorder %s169, %s170
      %p184 = scmp.eq.s32.totalorder %s29, 1
      %p185 = por %p183, %p184
      %p187 = scmp.ne.s32.totalorder %s170, %s186
      %p188 = scmp.eq.s32.totalorder %s29, 0
      %p189 = por %p187, %p188
      %s190 = ssub.s32 %s30, %s42
      %s191 = ssub.s32 %s31, %s38
      %s192 = sor.u32 %s190, %s191
      %p193 = scmp.eq.s32.totalorder %s192, 0
      %s195 = sadd.s32 %s194, 1
      %s196 = scalar_select %p193, %s194, %s195
      %p199 = pneg %p193
      %p200 = scmp.eq.s32.totalorder %s23, 1
      %p201 = por %p199, %p200
      %p202 = scmp.ne.s32.totalorder %s194, %s197
      %p203 = scmp.eq.s32.totalorder %s23, 0
      %p204 = por %p202, %p203
      %p205 = scmp.ne.s32.totalorder %s194, %s197
      %p206 = scmp.eq.s32.totalorder %s28, 1
      %p207 = por %p205, %p206
      %p208 = scmp.ne.s32.totalorder %s197, %s198
      %p209 = scmp.eq.s32.totalorder %s28, 0
      %p210 = por %p208, %p209
      %p211 = scmp.ne.s32.totalorder %s197, %s198
      %p212 = scmp.eq.s32.totalorder %s29, 1
      %p213 = por %p211, %p212
      %p215 = scmp.ne.s32.totalorder %s198, %s214
      %p216 = scmp.eq.s32.totalorder %s29, 0
      %p217 = por %p215, %p216
      %p218 = scmp.le.s32.totalorder 1, %s23
      %p219 = scmp.lt.s32.totalorder %s23, 3
      %p220 = pnand %p218, %p219
      %p221 = pneg %p220
      // Predicated region
      $region9: #{tpu_custom_call.1} parent=5 // pred_check
        _
      $region10: #{tpu_custom_call.1} parent=5 // pred_check_branch
        %223 = sbr.rel (%p220) target = $region12
      $region11: #{tpu_custom_call.1} parent=5 // pred_region
        %s224 = ssub.s32 %s23, 1
        // Predicated region
        $region13: #{tpu_custom_call.1} parent=11 // pred_check
          %p225 = pneg %p84
        $region14: #{tpu_custom_call.1} parent=11 // pred_check_branch
          %227 = sbr.rel (%p225) target = $region16
        $region15: #{tpu_custom_call.1} parent=11 // pred_region
          %229 = vsyncadd [#allocation6], 0
          %s231 = sshll.u32 %s1, 4
          %s232 = int_to_ptr.hbm [resolvable:$true] %s231
          %s233 = sshll.u32 [#allocation5], 4
          %s234 = int_to_ptr.vmem [resolvable:$true] %s233
          %236 = dma.hbm_to_vmem [thread:$0]  %s232, 16, %s234, [#allocation6]
        $region16: #{tpu_custom_call.1} parent=11 // pred_fallthru
          _
        // Predicated region
        $region17: #{tpu_custom_call.1} parent=11 // pred_check
          %p237 = pneg %p105
        $region18: #{tpu_custom_call.1} parent=11 // pred_check_branch
          %239 = sbr.rel (%p237) target = $region20
        $region19: #{tpu_custom_call.1} parent=11 // pred_region
          _
        $region20: #{tpu_custom_call.1} parent=11 // pred_fallthru
          _
        // Predicated region
        $region21: #{tpu_custom_call.1} parent=11 // pred_check
          %p240 = pneg %p126
        $region22: #{tpu_custom_call.1} parent=11 // pred_check_branch
          %242 = sbr.rel (%p240) target = $region24
        $region23: #{tpu_custom_call.1} parent=11 // pred_region
          %244 = vsyncadd [#allocation6], 0
          %s245 = sshll.u32 %s3, 4
          %s246 = int_to_ptr.hbm [resolvable:$true] %s245
          %s247 = sshll.u32 [#allocation7], 4
          %s248 = int_to_ptr.vmem [resolvable:$true] %s247
          %253 = dma.hbm_to_vmem [thread:$0]  %s246, 512, %s248, [#allocation6], 128, 128, 8
        $region24: #{tpu_custom_call.1} parent=11 // pred_fallthru
          _
      $region12: #{tpu_custom_call.1} parent=5 // pred_fallthru
        _
      %p254 = scmp.lt.s32.totalorder %s23, 2
      // Predicated region
      $region25: #{tpu_custom_call.1} parent=5 // pred_check
        %p255 = pneg %p254
      $region26: #{tpu_custom_call.1} parent=5 // pred_check_branch
        %257 = sbr.rel (%p255) target = $region28
      $region27: #{tpu_custom_call.1} parent=5 // pred_region
        // Predicated region
        $region29: #{tpu_custom_call.1} parent=27 // pred_check
          %p258 = pneg %p57
        $region30: #{tpu_custom_call.1} parent=27 // pred_check_branch
          %260 = sbr.rel (%p258) target = $region32
        $region31: #{tpu_custom_call.1} parent=27 // pred_region
          %s261 = sand.u32 %s47, 1
          %s262 = scalar_lea.sflag [#allocation3], %s261
          %s263 = sand.u32 %s47, 1
          %s264 = smul.addr %s263, 8
          %s265 = scalar_lea.vmem [#allocation2], %s264
          %267 = vsyncadd %s262, 0
          %s268 = sadd.s32 %s31, %s30
          %s269 = smul.addr %s268, 8
          %s270 = scalar_lea.hbm %s0, %s269
          %s272 = sshll.u32 %s270, 4
          %s273 = int_to_ptr.hbm [resolvable:$true] %s272
          %s274 = sshll.u32 %s265, 4
          %s275 = int_to_ptr.vmem [resolvable:$true] %s274
          %277 = dma.hbm_to_vmem [thread:$0]  %s273, 128, %s275, %s262
        $region32: #{tpu_custom_call.1} parent=27 // pred_fallthru
          _
      $region28: #{tpu_custom_call.1} parent=5 // pred_fallthru
        _
      %p278 = scmp.le.s32.totalorder 1, %s23
      %p279 = scmp.lt.s32.totalorder %s23, 3
      %p280 = pnand %p278, %p279
      %p281 = pneg %p280
      // Predicated region
      $region33: #{tpu_custom_call.1} parent=5 // pred_check
        _
      $region34: #{tpu_custom_call.1} parent=5 // pred_check_branch
        %283 = sbr.rel (%p280) target = $region36
      $region35: #{tpu_custom_call.1} parent=5 // pred_region
        %s284 = ssub.s32 %s23, 1
        %s285 = sand.u32 %s50, 1
        %s286 = scalar_lea.sflag [#allocation3], %s285
        %s287 = sand.u32 %s50, 1
        %s288 = smul.addr %s287, 8
        %s289 = scalar_lea.vmem [#allocation2], %s288
        // Predicated region
        $region37: #{tpu_custom_call.1} parent=35 // pred_check
          %p290 = pneg %p63
        $region38: #{tpu_custom_call.1} parent=35 // pred_check_branch
          %292 = sbr.rel (%p290) target = $region40
        $region39: #{tpu_custom_call.1} parent=35 // pred_region
          %294 = dma.done %s286, 128
        $region40: #{tpu_custom_call.1} parent=35 // pred_fallthru
          _
        // Predicated region
        $region41: #{tpu_custom_call.1} parent=35 // pred_check
          %p295 = pneg %p84
        $region42: #{tpu_custom_call.1} parent=35 // pred_check_branch
          %297 = sbr.rel (%p295) target = $region44
        $region43: #{tpu_custom_call.1} parent=35 // pred_region
          %299 = dma.done [#allocation6], 16
        $region44: #{tpu_custom_call.1} parent=35 // pred_fallthru
          _
        // Predicated region
        $region45: #{tpu_custom_call.1} parent=35 // pred_check
          %p300 = pneg %p126
        $region46: #{tpu_custom_call.1} parent=35 // pred_check_branch
          %302 = sbr.rel (%p300) target = $region48
        $region47: #{tpu_custom_call.1} parent=35 // pred_region
          %304 = dma.done [#allocation6], 512
        $region48: #{tpu_custom_call.1} parent=35 // pred_fallthru
          _
        %s305 = sand.u32 %s50, 1
        %s306 = scalar_lea.sflag [#allocation3], %s305
        %s307 = sand.u32 %s50, 1
        %s308 = smul.addr %s307, 8
        %s309 = scalar_lea.vmem [#allocation2], %s308
        %p310 = pneg %p63
        %p311 = pneg %p60
        %p312 = pneg %p84
        %p313 = pneg %p81
        %p314 = pneg %p105
        %p315 = pneg %p102
        %p316 = pneg %p126
        %p317 = pneg %p123
        %p318 = pneg %p154
        %p319 = pneg %p151
        %s320 = sand.u32 %s141, 1
        %s321 = scalar_lea.sflag [#allocation4], %s320
        %s322 = sand.u32 %s141, 1
        %s323 = smul.addr %s322, 8
        %s324 = scalar_lea.vmem [#allocation8], %s323
        %p325 = pneg %p182
        %p326 = pneg %p179
        %s327 = sand.u32 %s28, 1
        %s328 = scalar_lea.sflag [#allocation10], %s327
        %s329 = sand.u32 %s169, 1
        %s330 = smul.addr %s329, 8
        %s331 = scalar_lea.vmem [#allocation9], %s330
        %p332 = pneg %p210
        %p333 = pneg %p207
        %s334 = sand.u32 %s28, 1
        %s335 = scalar_lea.sflag [#allocation10], %s334
        %s336 = sand.u32 %s197, 1
        %s337 = smul.addr %s336, 8
        %s338 = scalar_lea.vmem [#allocation11], %s337
        %v339 = vld [vmem:[%s289] sm:$0xff]
        %vm340 = vcmask 261120
        %v341 = vsel %vm340, %v339, 0.0
        %342 = vadd.xlane.f32.xlu0 %v341
        %v343 = vpop.xlane.xlu0 %342
        %v344 = vrcp.pop 32.0
        %v345 = vmul.f32 32.0, %v344
        %v346 = vsub.f32 1.0, %v345
        %v347 = vmul.f32 %v344, %v346
        %v348 = vadd.f32 %v344, %v347
        %vm349 = vweird.f32 %v344
        %v350 = vsel %vm349, %v344, %v348
        %v351 = vmul.f32 %v343, %v350
        %v352 = vsub.f32 %v339, %v351
        %v353 = vmul.f32 %v352, %v352
        %v354 = vsel %vm340, %v353, 0.0
        %355 = vadd.xlane.f32.xlu0 %v354
        %v356 = vpop.xlane.xlu0 %355
        %v357 = vmul.f32 %v356, %v350
        %v358 = vadd.f32 %v357, 1e-05
        %v359 = vrsqrt.pop %v358
        %v360 = vmul.f32 %v359, %v358
        %v361 = vmul.f32 %v360, %v359
        %v362 = vmul.f32 0.5, %v361
        %v363 = vsub.f32 1.5, %v362
        %v364 = vmul.f32 %v359, %v363
        %vm365 = vweird.f32 %v358
        %vm366 = vweird.f32 %v359
        %vm367 = vmor %vm365, %vm366
        %v368 = vsel %vm367, %v359, %v364
        %v369 = vmul.f32 %v352, %v368
        %v370 = vld [vmem:[#allocation5] sm:$0x1]
        %v372 = vperm.slane %v370, 0
        %v374 = vmul.f32 %v369, %v372
        %v375 = vld [vmem:[%s2] sm:$0x1]
        %v377 = vperm.slane %v375, 0
        %v379 = vadd.f32 %v374, %v377
        %v380 = vld [vmem:[#allocation7] sm:$0xff]
        %v381 = vld [vmem:[#allocation7 + $0x8] sm:$0xff]
        %v382 = vld [vmem:[#allocation7 + $0x10] sm:$0xff]
        %v383 = vld [vmem:[#allocation7 + $0x18] sm:$0xff]
        %v385 = vsel %vm340, %v379, 0
        %387 = vmatpush.msra.mxu0 0.0
        %388 = vmatpush.msra.mxu0 0.0
        %389 = vmatpush.msra.mxu0 0.0
        %390 = vmatpush.msra.mxu0 0.0
        %391 = vmatpush.msra.mxu0 0.0
        %392 = vmatpush.msra.mxu0 0.0
        %393 = vmatpush.msra.mxu0 0.0
        %394 = vmatpush.msra.mxu0 0.0
        %395 = vmatpush.msra.mxu0 0.0
        %396 = vmatpush.msra.mxu0 0.0
        %397 = vmatpush.msra.mxu0 0.0
        %398 = vmatpush.msra.mxu0 0.0
        %399 = vmatpush.msra.mxu0 %v383
        %400 = vmatpush.msra.mxu0 %v382
        %401 = vmatpush.msra.mxu0 %v381
        %402 = vmatpush.msra.mxu0 %v380
        %403 = vmatmul.f32.gmra.mxu0 %v385
        %v404 = vpop.f32.mrf.mxu0
        %v405 = vadd.f32 0.0, %v404
        %406 = vdwg.mxu0
        %407 = vst.msk [vmem:[%s324] sm:$0xff] %vm340, %v405
        %409 = vrot.lane.b32.xlu0 %v405, 96
        %v410 = vpop.permute.xlu0 %409
        %412 = vst.msk [vmem:[%s331] sm:$0xff] %vm340, %v410
        %413 = vrot.lane.b32.xlu0 %v405, 64
        %v414 = vpop.permute.xlu0 %413
        %416 = vst.msk [vmem:[%s338] sm:$0xff] %vm340, %v414
        %s417 = sand.u32 %s141, 1
        %s418 = scalar_lea.sflag [#allocation4], %s417
        %s419 = sand.u32 %s141, 1
        %s420 = smul.addr %s419, 8
        %s421 = scalar_lea.vmem [#allocation8], %s420
        %s422 = sand.u32 %s28, 1
        %s423 = scalar_lea.sflag [#allocation10], %s422
        %s424 = sand.u32 %s169, 1
        %s425 = smul.addr %s424, 8
        %s426 = scalar_lea.vmem [#allocation9], %s425
        %s427 = sand.u32 %s28, 1
        %s428 = scalar_lea.sflag [#allocation10], %s427
        %s429 = sand.u32 %s197, 1
        %s430 = smul.addr %s429, 8
        %s431 = scalar_lea.vmem [#allocation11], %s430
        // Predicated region
        $region49: #{tpu_custom_call.1} parent=35 // pred_check
          %p432 = pneg %p151
        $region50: #{tpu_custom_call.1} parent=35 // pred_check_branch
          %434 = sbr.rel (%p432) target = $region52
        $region51: #{tpu_custom_call.1} parent=35 // pred_region
          %436 = vsyncadd %s418, 0
          %s437 = sadd.s32 %s33, %s32
          %s438 = smul.addr %s437, 8
          %s439 = scalar_lea.hbm %s4, %s438
          %s441 = sshll.u32 %s421, 4
          %s442 = int_to_ptr.vmem [resolvable:$true] %s441
          %s443 = sshll.u32 %s439, 4
          %s444 = int_to_ptr.hbm [resolvable:$true] %s443
          %446 = dma.vmem_to_hbm [thread:$0]  %s442, 128, %s444, %s418
        $region52: #{tpu_custom_call.1} parent=35 // pred_fallthru
          _
        // Predicated region
        $region53: #{tpu_custom_call.1} parent=35 // pred_check
          %p447 = pneg %p179
        $region54: #{tpu_custom_call.1} parent=35 // pred_check_branch
          %449 = sbr.rel (%p447) target = $region56
        $region55: #{tpu_custom_call.1} parent=35 // pred_region
          %451 = vsyncadd %s423, 0
          %s452 = sadd.s32 %s33, %s32
          %s453 = smul.addr %s452, 8
          %s454 = scalar_lea.hbm %s5, %s453
          %s456 = sshll.u32 %s426, 4
          %s457 = int_to_ptr.vmem [resolvable:$true] %s456
          %s458 = sshll.u32 %s454, 4
          %s459 = int_to_ptr.hbm [resolvable:$true] %s458
          %461 = dma.vmem_to_hbm [thread:$0]  %s457, 128, %s459, %s423
        $region56: #{tpu_custom_call.1} parent=35 // pred_fallthru
          _
        // Predicated region
        $region57: #{tpu_custom_call.1} parent=35 // pred_check
          %p462 = pneg %p207
        $region58: #{tpu_custom_call.1} parent=35 // pred_check_branch
          %464 = sbr.rel (%p462) target = $region60
        $region59: #{tpu_custom_call.1} parent=35 // pred_region
          %466 = vsyncadd %s428, 0
          %s467 = sadd.s32 %s33, %s32
          %s468 = smul.addr %s467, 8
          %s469 = scalar_lea.hbm %s6, %s468
          %s471 = sshll.u32 %s431, 4
          %s472 = int_to_ptr.vmem [resolvable:$true] %s471
          %s473 = sshll.u32 %s469, 4
          %s474 = int_to_ptr.hbm [resolvable:$true] %s473
          %476 = dma.vmem_to_hbm [thread:$0]  %s472, 128, %s474, %s428
        $region60: #{tpu_custom_call.1} parent=35 // pred_fallthru
          _
      $region36: #{tpu_custom_call.1} parent=5 // pred_fallthru
        _
      %p477 = scmp.le.s32.totalorder 2, %s23
      // Predicated region
      $region61: #{tpu_custom_call.1} parent=5 // pred_check
        %p478 = pneg %p477
      $region62: #{tpu_custom_call.1} parent=5 // pred_check_branch
        %480 = sbr.rel (%p478) target = $region64
      $region63: #{tpu_custom_call.1} parent=5 // pred_region
        %s481 = ssub.s32 %s23, 2
        // Predicated region
        $region65: #{tpu_custom_call.1} parent=63 // pred_check
          %p482 = pneg %p157
        $region66: #{tpu_custom_call.1} parent=63 // pred_check_branch
          %484 = sbr.rel (%p482) target = $region68
        $region67: #{tpu_custom_call.1} parent=63 // pred_region
          %s485 = sand.u32 %s142, 1
          %s486 = scalar_lea.sflag [#allocation4], %s485
          %s487 = sand.u32 %s142, 1
          %s488 = smul.addr %s487, 8
          %s489 = scalar_lea.vmem [#allocation8], %s488
          %491 = dma.done %s486, 128
        $region68: #{tpu_custom_call.1} parent=63 // pred_fallthru
          _
        // Predicated region
        $region69: #{tpu_custom_call.1} parent=63 // pred_check
          %p492 = pneg %p185
        $region70: #{tpu_custom_call.1} parent=63 // pred_check_branch
          %494 = sbr.rel (%p492) target = $region72
        $region71: #{tpu_custom_call.1} parent=63 // pred_region
          %s495 = sand.u32 %s29, 1
          %s496 = scalar_lea.sflag [#allocation10], %s495
          %s497 = sand.u32 %s170, 1
          %s498 = smul.addr %s497, 8
          %s499 = scalar_lea.vmem [#allocation9], %s498
          %501 = dma.done %s496, 128
        $region72: #{tpu_custom_call.1} parent=63 // pred_fallthru
          _
        // Predicated region
        $region73: #{tpu_custom_call.1} parent=63 // pred_check
          %p502 = pneg %p213
        $region74: #{tpu_custom_call.1} parent=63 // pred_check_branch
          %504 = sbr.rel (%p502) target = $region76
        $region75: #{tpu_custom_call.1} parent=63 // pred_region
          %s505 = sand.u32 %s29, 1
          %s506 = scalar_lea.sflag [#allocation10], %s505
          %s507 = sand.u32 %s198, 1
          %s508 = smul.addr %s507, 8
          %s509 = scalar_lea.vmem [#allocation11], %s508
          %511 = dma.done %s506, 128
        $region76: #{tpu_custom_call.1} parent=63 // pred_fallthru
          _
      $region64: #{tpu_custom_call.1} parent=5 // pred_fallthru
        _
    $region6: #{tpu_custom_call.1} parent=1 // loop_footer
      %s27 = sadd.s32 1, %s23
    $region7: #{tpu_custom_call.1} parent=1 // loop_footer_branch
      %22 = sbr.rel target = $region3
    $region8: #{tpu_custom_call.1} parent=1 // loop_exit
      _
    %512 = vsyncpa [#allocation3], 1
    %s513 = scalar_lea.sflag [#allocation3], 1
    %514 = vsyncpa %s513, 1
    %515 = vsyncpa [#allocation6], 1
    %516 = vsyncpa [#allocation4], 1
    %s517 = scalar_lea.sflag [#allocation4], 1
    %518 = vsyncpa %s517, 1
    %519 = vsyncpa [#allocation10], 1
    %s520 = scalar_lea.sflag [#allocation10], 1
    %521 = vsyncpa %s520, 1

</llo_original>
